<compile_context>
chip_gen: v6e
topology: v6e:2x2x1
jax: 0.10.0
libtpu: 0.0.40
codegen_flags: <defaults>
</compile_context>

<pallas_src>
import functools

import jax
import jax.numpy as jnp
from jax.experimental import pallas as pl
from jax.experimental.pallas import tpu as pltpu

GAMMA = 1.5   # modulating-factor exponent; t**1.5 == t*sqrt(t) used below
ALPHA = 0.25

LANES = 128
SUBLANES = 8


def _focal_elementwise(x, y):
    """Elementwise focal-BCE loss (pre-reduction), computed in f32."""
    x = x.astype(jnp.float32)
    y = y.astype(jnp.float32)

    # One exp per element, reused by both the stable BCE and the sigmoid.
    z = jnp.exp(-jnp.abs(x))
    bce = jnp.maximum(x, 0.0) - x * y + jnp.log1p(z)

    # sigmoid(x): r = 1/(1+z) == sigmoid(|x|); mirror for negative x.
    # (approx=False keeps full f32 accuracy for the mean-loss tolerance.)
    r = pl.reciprocal(1.0 + z, approx=False)
    p = jnp.where(x >= 0.0, r, 1.0 - r)

    p_t = y * p + (1.0 - y) * (1.0 - p)
    alpha_factor = y * ALPHA + (1.0 - y) * (1.0 - ALPHA)
    t = 1.0 - p_t
    modulating_factor = t * jnp.sqrt(t)   # == t**1.5 (gamma == 1.5)
    return bce * alpha_factor * modulating_factor


def _focal_single_block_kernel(pred_ref, true_ref, out_ref, *, inv_n):
    loss = _focal_elementwise(pred_ref[...], true_ref[...])
    out_ref[...] = jnp.sum(loss, keepdims=True) * jnp.float32(inv_n)


def _focal_tiled_kernel(pred_ref, true_ref, out_ref, acc_ref, *, inv_n):
    @pl.when(pl.program_id(0) == 0)
    def _():
        acc_ref[...] = jnp.zeros_like(acc_ref)

    # Elementwise VPU accumulate; no per-step cross-lane reduction / SMEM RAW chain.
    acc_ref[...] += _focal_elementwise(pred_ref[...], true_ref[...])

    @pl.when(pl.program_id(0) == pl.num_programs(0) - 1)
    def _():
        out_ref[...] = jnp.sum(acc_ref[...], keepdims=True) * jnp.float32(inv_n)


def focal_loss_pallas(pred, true, *, max_block_rows=1024):
    """pred, true: arrays of identical shape (e.g. NCHW logits / targets).

    Returns the scalar mean focal loss (reduction='mean', like the module)."""
    assert pred.shape == true.shape
    total_n = pred.size
    assert total_n % (SUBLANES * LANES) == 0, (
        "element count must be a multiple of 8*128 for the lane-dense layout")

    rows = total_n // LANES
    pred2d = pred.reshape(rows, LANES)
    true2d = true.reshape(rows, LANES)
    inv_n = 1.0 / float(total_n)

    if rows <= max_block_rows:
        # Grid-free: whole problem as one VMEM block (8 KiB/operand at the
        # example shape) — no grid-step overhead, no accumulator.
        kernel = functools.partial(_focal_single_block_kernel, inv_n=inv_n)
        out = pl.pallas_call(
            kernel,
            out_shape=jax.ShapeDtypeStruct((1, 1), jnp.float32),
        )(pred2d, true2d)
        return out[0, 0]

    # Large inputs: large row-block grid + VMEM vector accumulator.
    # Block bytes @ f32: 1024*128*4 = 512 KiB -> 2 inputs x 2 pipeline buffers
    # + accumulator ~ 2.5 MiB, comfortably inside v7x's 32 MiB scoped VMEM.
    block_rows = max_block_rows - (max_block_rows % SUBLANES)
    while rows % block_rows != 0:
        block_rows -= SUBLANES
    grid = (rows // block_rows,)

    kernel = functools.partial(_focal_tiled_kernel, inv_n=inv_n)
    out = pl.pallas_call(
        kernel,
        out_shape=jax.ShapeDtypeStruct((1, 1), jnp.float32),
        grid_spec=pltpu.PrefetchScalarGridSpec(
            num_scalar_prefetch=0,
            grid=grid,
            in_specs=[
                pl.BlockSpec((block_rows, LANES), lambda i: (i, 0)),
                pl.BlockSpec((block_rows, LANES), lambda i: (i, 0)),
            ],
            out_specs=pl.BlockSpec((1, 1), lambda i: (0, 0)),
            scratch_shapes=[pltpu.VMEM((block_rows, LANES), jnp.float32)],
        ),
        # Accumulator is carried across the grid axis -> "arbitrary".
        # TODO(synk): emit per-block partial sums + "parallel" semantics so
        # v7x's two TensorCores can split the grid for very large inputs.
        compiler_params=pltpu.CompilerParams(
            dimension_semantics=("arbitrary",),
        ),
    )(pred2d, true2d)
    return out[0, 0]


def focal_loss_ref(pred, true):
    """Pure-JAX reference mirroring the PyTorch module (reduction='mean')."""
    x = pred.astype(jnp.float32)
    y = true.astype(jnp.float32)
    bce = jnp.maximum(x, 0.0) - x * y + jnp.log1p(jnp.exp(-jnp.abs(x)))
    p = jax.nn.sigmoid(x)
    p_t = y * p + (1.0 - y) * (1.0 - p)
    alpha_factor = y * ALPHA + (1.0 - y) * (1.0 - ALPHA)
    modulating_factor = (1.0 - p_t) ** GAMMA
    return jnp.mean(bce * alpha_factor * modulating_factor)


if __name__ == "__main__":
    key = jax.random.PRNGKey(0)
    k1, k2, k3, k4 = jax.random.split(key, 4)

    # NCHW, small shapes: batch=2, channels=4, spatial=16x16 (single-block path).
    pred = jax.random.normal(k1, (2, 4, 16, 16), dtype=jnp.float32)
    true = (jax.random.uniform(k2, (2, 4, 16, 16)) > 0.5).astype(jnp.float32)

    out = jax.block_until_ready(focal_loss_pallas(pred, true))
    ref = focal_loss_ref(pred, true)
    assert jnp.allclose(out, ref, rtol=1e-5, atol=1e-6), (out, ref)

    # Also exercise the tiled VMEM-accumulator path (forced small block size).
    pred2 = jax.random.normal(k3, (2, 4, 64, 64), dtype=jnp.float32)
    true2 = (jax.random.uniform(k4, (2, 4, 64, 64)) > 0.5).astype(jnp.float32)
    out2 = jax.block_until_ready(
        focal_loss_pallas(pred2, true2, max_block_rows=128))
    ref2 = focal_loss_ref(pred2, true2)
    assert jnp.allclose(out2, ref2, rtol=1e-5, atol=1e-6), (out2, ref2)

    print("KERNEL_OK")
</pallas_src>

<mosaic_0001>
module attributes {stable_mosaic.version = 11 : i64} {
  func.func @_focal_single_block_kernel(%arg0: memref<16x128xf32, #tpu.memory_space<vmem>>, %arg1: memref<16x128xf32, #tpu.memory_space<vmem>>, %arg2: memref<1x1xf32, #tpu.memory_space<vmem>>) attributes {dimension_semantics = [], scalar_prefetch = 0 : i64, scratch_operands = 0 : i64, tpu.core_type = #tpu.core_type<tc>} {
    %c0 = arith.constant 0 : index
    %c0_0 = arith.constant 0 : index
    %0 = vector.load %arg0[%c0, %c0_0] : memref<16x128xf32, #tpu.memory_space<vmem>>, vector<16x128xf32>
    %c0_1 = arith.constant 0 : index
    %c0_2 = arith.constant 0 : index
    %1 = vector.load %arg1[%c0_1, %c0_2] : memref<16x128xf32, #tpu.memory_space<vmem>>, vector<16x128xf32>
    %2 = math.absf %0 : vector<16x128xf32>
    %cst = arith.constant 0.000000e+00 : f32
    %3 = vector.broadcast %cst : f32 to vector<16x128xf32>
    %4 = arith.subf %3, %2 : vector<16x128xf32>
    %5 = math.exp %4 : vector<16x128xf32>
    %cst_3 = arith.constant 0.000000e+00 : f32
    %6 = vector.broadcast %cst_3 : f32 to vector<16x128xf32>
    %7 = arith.maximumf %0, %6 : vector<16x128xf32>
    %8 = arith.mulf %0, %1 : vector<16x128xf32>
    %9 = arith.subf %7, %8 : vector<16x128xf32>
    %10 = math.log1p %5 : vector<16x128xf32>
    %11 = arith.addf %9, %10 : vector<16x128xf32>
    %cst_4 = arith.constant 1.000000e+00 : f32
    %12 = vector.broadcast %cst_4 : f32 to vector<16x128xf32>
    %13 = arith.addf %12, %5 : vector<16x128xf32>
    %14 = tpu.reciprocal %13 : vector<16x128xf32> -> vector<16x128xf32>
    %cst_5 = arith.constant 0.000000e+00 : f32
    %15 = vector.broadcast %cst_5 : f32 to vector<16x128xf32>
    %16 = arith.cmpf oge, %0, %15 : vector<16x128xf32>
    %cst_6 = arith.constant 1.000000e+00 : f32
    %17 = vector.broadcast %cst_6 : f32 to vector<16x128xf32>
    %18 = arith.subf %17, %14 : vector<16x128xf32>
    %19 = arith.select %16, %14, %18 : vector<16x128xi1>, vector<16x128xf32>
    %20 = arith.mulf %1, %19 : vector<16x128xf32>
    %cst_7 = arith.constant 1.000000e+00 : f32
    %21 = vector.broadcast %cst_7 : f32 to vector<16x128xf32>
    %22 = arith.subf %21, %1 : vector<16x128xf32>
    %cst_8 = arith.constant 1.000000e+00 : f32
    %23 = vector.broadcast %cst_8 : f32 to vector<16x128xf32>
    %24 = arith.subf %23, %19 : vector<16x128xf32>
    %25 = arith.mulf %22, %24 : vector<16x128xf32>
    %26 = arith.addf %20, %25 : vector<16x128xf32>
    %cst_9 = arith.constant 2.500000e-01 : f32
    %27 = vector.broadcast %cst_9 : f32 to vector<16x128xf32>
    %28 = arith.mulf %1, %27 : vector<16x128xf32>
    %cst_10 = arith.constant 1.000000e+00 : f32
    %29 = vector.broadcast %cst_10 : f32 to vector<16x128xf32>
    %30 = arith.subf %29, %1 : vector<16x128xf32>
    %cst_11 = arith.constant 7.500000e-01 : f32
    %31 = vector.broadcast %cst_11 : f32 to vector<16x128xf32>
    %32 = arith.mulf %30, %31 : vector<16x128xf32>
    %33 = arith.addf %28, %32 : vector<16x128xf32>
    %cst_12 = arith.constant 1.000000e+00 : f32
    %34 = vector.broadcast %cst_12 : f32 to vector<16x128xf32>
    %35 = arith.subf %34, %26 : vector<16x128xf32>
    %36 = math.sqrt %35 : vector<16x128xf32>
    %37 = arith.mulf %35, %36 : vector<16x128xf32>
    %38 = arith.mulf %11, %33 : vector<16x128xf32>
    %39 = arith.mulf %38, %37 : vector<16x128xf32>
    %40 = vector.shape_cast %39 : vector<16x128xf32> to vector<1x16x128xf32>
    %cst_13 = arith.constant dense<0.000000e+00> : vector<1xf32>
    %41 = vector.multi_reduction <add>, %40, %cst_13 [1, 2] : vector<1x16x128xf32> to vector<1xf32>
    %42 = vector.shape_cast %41 : vector<1xf32> to vector<1x1x1xf32>
    %43 = vector.extract %42[0, 0, 0] : f32 from vector<1x1x1xf32>
    %44 = vector.broadcast %43 : f32 to vector<1x1xf32>
    %cst_14 = arith.constant 4.8828125E-4 : f32
    %45 = vector.broadcast %cst_14 : f32 to vector<1x1xf32>
    %46 = arith.mulf %44, %45 : vector<1x1xf32>
    %c0_15 = arith.constant 0 : index
    %c0_16 = arith.constant 0 : index
    %47 = vector.load %arg2[%c0_15, %c0_16] : memref<1x1xf32, #tpu.memory_space<vmem>>, vector<1x1xf32>
    tpu.vector_store %arg2[%c0_15, %c0_16], %46 {strides = array<i32>} : memref<1x1xf32, #tpu.memory_space<vmem>>, vector<1x1xf32>,
    return
  }
}

</mosaic_0001>

<llo_original>
// kernel: tpu_custom_call.1
$region0: #{tpu_custom_call.1}
  #allocation0 [shape = 'u32[]', space=smem, size = 0x4, offset = 0x4, fixed_abs, tag = 'smem constant byte address 0x4 - core index']
  #allocation1 [shape = 'u32[144,128]{1,0:T(1,128)}', space=vmem, size = 0x12000, scoped, tag = 'internal scratch']
  %s0 = inlined_call_operand.hbm [shape: f32[16,128], index: 0, kind: input, shape index: {}]
  %s1 = inlined_call_operand.hbm [shape: f32[16,128], index: 1, kind: input, shape index: {}]
  %s2 = inlined_call_operand.hbm [shape: f32[1,1], index: 2, kind: output, shape index: {}]
  %s3 = sld [smem:[#allocation0]]
  $region26: #{tpu_custom_call.1} parent=0
    _
  %s5 = ssub.s32 1, %s3
  %s6 = scalar_select 0, %s5, %s3
  $region1: #{tpu_custom_call.1} parent=0
    #allocation2 [shape = 'u8[8192]{0}', space=vmem, size = 0x2000, scoped, tag = 'input window, operand 0, single buffered']
    #allocation3 [shape = 's32[1]{0}', space=sflag, size = 0x4, scoped, tag = 'scoped memory for tpu_custom_call.1']
    #allocation4 [shape = 's32[1]{0}', space=sflag, size = 0x4, scoped, tag = 'scoped memory for tpu_custom_call.1']
    #allocation5 [shape = 'u8[8192]{0}', space=vmem, size = 0x2000, scoped, tag = 'input window, operand 1, single buffered']
    #allocation6 [shape = 's32[1]{0}', space=sflag, size = 0x4, scoped, tag = 'scoped memory for tpu_custom_call.1']
    #allocation7 [shape = 'u8[512]{0}', space=vmem, size = 0x400, scoped, tag = 'output window, operand 0, single buffered']
    %7 = vsyncpa [#allocation3], 0
    %8 = vsyncpa [#allocation6], 0
    %9 = vsyncpa [#allocation4], 0
    // Predicated region
    $region2: #{tpu_custom_call.1} parent=1 // pred_check
      _
    $region3: #{tpu_custom_call.1} parent=1 // pred_check_branch
      %11 = sbr.rel (0) target = $region5
    $region4: #{tpu_custom_call.1} parent=1 // pred_region
      %s13 = ssub.s32 256, 256
      %14 = vsyncadd [#allocation3], %s13
      %s15 = sshll.u32 [#allocation2], 4
      %s16 = int_to_ptr.vmem [resolvable:$true] %s15
      %21 = dma.hbm_to_vmem [thread:$0]  %s0, 256, %s16, [#allocation3], 128, 128, 8
    $region5: #{tpu_custom_call.1} parent=1 // pred_fallthru
      _
    // Predicated region
    $region6: #{tpu_custom_call.1} parent=1 // pred_check
      _
    $region7: #{tpu_custom_call.1} parent=1 // pred_check_branch
      %23 = sbr.rel (0) target = $region9
    $region8: #{tpu_custom_call.1} parent=1 // pred_region
      %s25 = ssub.s32 256, 256
      %26 = vsyncadd [#allocation6], %s25
      %s27 = sshll.u32 [#allocation5], 4
      %s28 = int_to_ptr.vmem [resolvable:$true] %s27
      %33 = dma.hbm_to_vmem [thread:$0]  %s1, 256, %s28, [#allocation6], 128, 128, 8
    $region9: #{tpu_custom_call.1} parent=1 // pred_fallthru
      _
    // Predicated region
    $region10: #{tpu_custom_call.1} parent=1 // pred_check
      _
    $region11: #{tpu_custom_call.1} parent=1 // pred_check_branch
      %35 = sbr.rel (0) target = $region13
    $region12: #{tpu_custom_call.1} parent=1 // pred_region
      %36 = dma.done [#allocation3], 256
    $region13: #{tpu_custom_call.1} parent=1 // pred_fallthru
      _
    // Predicated region
    $region14: #{tpu_custom_call.1} parent=1 // pred_check
      _
    $region15: #{tpu_custom_call.1} parent=1 // pred_check_branch
      %38 = sbr.rel (0) target = $region17
    $region16: #{tpu_custom_call.1} parent=1 // pred_region
      %39 = dma.done [#allocation6], 256
    $region17: #{tpu_custom_call.1} parent=1 // pred_fallthru
      _
    %v40 = vld [vmem:[#allocation2] sm:$0xff]
    %v41 = vld [vmem:[#allocation2 + $0x8] sm:$0xff]
    %v42 = vld [vmem:[#allocation5] sm:$0xff]
    %v43 = vld [vmem:[#allocation5 + $0x8] sm:$0xff]
    %v44 = vand.u32 2147483647, %v40
    %v45 = vand.u32 2147483647, %v41
    %v46 = vsub.f32 0.0, %v44
    %v47 = vsub.f32 0.0, %v45
    %v48 = vmul.f32 %v46, 1.442695
    %v49 = vpow.pop %v48
    %v50 = vmul.f32 %v47, 1.442695
    %v51 = vpow.pop %v50
    %v52 = vmax.f32 %v40, 0.0
    %v53 = vmax.f32 %v41, 0.0
    %v54 = vmul.f32 %v40, %v42
    %v55 = vmul.f32 %v41, %v43
    %v56 = vsub.f32 %v52, %v54
    %v57 = vsub.f32 %v53, %v55
    %v58 = vadd.f32 %v49, 1.0
    %v59 = vlog2.pop %v58
    %v60 = vmul.f32 %v59, 0.6931472
    %v61 = vmul.f32 -0.5, %v49
    %v62 = vadd.f32 %v61, 1.0
    %v63 = vmul.f32 %v62, %v49
    %v64 = vand.u32 2147483647, %v49
    %vm65 = vcmp.lt.f32.partialorder %v64, 0.0004427343
    %v66 = vsel %vm65, %v63, %v60
    %v67 = vadd.f32 %v51, 1.0
    %v68 = vlog2.pop %v67
    %v69 = vmul.f32 %v68, 0.6931472
    %v70 = vmul.f32 -0.5, %v51
    %v71 = vadd.f32 %v70, 1.0
    %v72 = vmul.f32 %v71, %v51
    %v73 = vand.u32 2147483647, %v51
    %vm74 = vcmp.lt.f32.partialorder %v73, 0.0004427343
    %v75 = vsel %vm74, %v72, %v69
    %v76 = vadd.f32 %v56, %v66
    %v77 = vadd.f32 %v57, %v75
    %v78 = vadd.f32 %v49, 1.0
    %v79 = vadd.f32 %v51, 1.0
    %v80 = vrcp.pop %v78
    %v81 = vrcp.pop %v79
    %vm82 = vcmp.ge.f32.partialorder %v40, 0.0
    %vm83 = vcmp.ge.f32.partialorder %v41, 0.0
    %v84 = vsub.f32 1.0, %v80
    %v85 = vsub.f32 1.0, %v81
    %v86 = vsel %vm82, %v80, %v84
    %v87 = vsel %vm83, %v81, %v85
    %v88 = vmul.f32 %v42, %v86
    %v89 = vmul.f32 %v43, %v87
    %v90 = vsub.f32 1.0, %v42
    %v91 = vsub.f32 1.0, %v43
    %v92 = vsub.f32 1.0, %v86
    %v93 = vsub.f32 1.0, %v87
    %v94 = vmul.f32 %v90, %v92
    %v95 = vmul.f32 %v91, %v93
    %v96 = vadd.f32 %v88, %v94
    %v97 = vadd.f32 %v89, %v95
    %v98 = vmul.f32 %v42, 0.25
    %v99 = vmul.f32 %v43, 0.25
    %v100 = vmul.f32 %v90, 0.75
    %v101 = vmul.f32 %v91, 0.75
    %v102 = vadd.f32 %v98, %v100
    %v103 = vadd.f32 %v99, %v101
    %v104 = vsub.f32 1.0, %v96
    %v105 = vsub.f32 1.0, %v97
    %v106 = vrsqrt.pop %v104
    %v107 = vmul.f32 %v104, %v106
    %vm108 = vcmp.eq.f32.partialorder %v104, inf
    %v109 = vsel %vm108, %v104, %v107
    %vm110 = vcmp.eq.f32.partialorder %v104, 0.0
    %v111 = vand.u32 %v104, 2147483648
    %v112 = vsel %vm110, %v111, %v109
    %v113 = vrsqrt.pop %v105
    %v114 = vmul.f32 %v105, %v113
    %vm115 = vcmp.eq.f32.partialorder %v105, inf
    %v116 = vsel %vm115, %v105, %v114
    %vm117 = vcmp.eq.f32.partialorder %v105, 0.0
    %v118 = vand.u32 %v105, 2147483648
    %v119 = vsel %vm117, %v118, %v116
    %v120 = vmul.f32 %v104, %v112
    %v121 = vmul.f32 %v105, %v119
    %v122 = vmul.f32 %v76, %v102
    %v123 = vmul.f32 %v77, %v103
    %v124 = vmul.f32 %v122, %v120
    %v125 = vmul.f32 %v123, %v121
    %v126 = vadd.f32 %v124, %v125
    %127 = vadd.xlane.f32.xlu0 %v126
    %v128 = vpop.xlane.xlu0 %127
    %v129 = vrot.slane %v128, 4
    %v130 = vadd.f32 %v128, %v129
    %v131 = vrot.slane %v130, 2
    %v132 = vadd.f32 %v130, %v131
    %v133 = vrot.slane %v132, 1
    %v134 = vadd.f32 %v132, %v133
    %s135 = vtos %v134
    %v136 = vstv %s135
    %v137 = vmul.f32 %v136, 0.00048828125
    %vm138 = vcmask 0
    %139 = vst.msk [vmem:[#allocation7] sm:$0x1] %vm138, %v137
    // Predicated region
    $region18: #{tpu_custom_call.1} parent=1 // pred_check
      _
    $region19: #{tpu_custom_call.1} parent=1 // pred_check_branch
      %141 = sbr.rel (0) target = $region21
    $region20: #{tpu_custom_call.1} parent=1 // pred_region
      %s143 = ssub.s32 16, 16
      %144 = vsyncadd [#allocation4], %s143
      %s146 = sshll.u32 [#allocation7], 4
      %s147 = int_to_ptr.vmem [resolvable:$true] %s146
      %149 = dma.vmem_to_hbm [thread:$0]  %s147, 16, %s2, [#allocation4]
    $region21: #{tpu_custom_call.1} parent=1 // pred_fallthru
      _
    // Predicated region
    $region22: #{tpu_custom_call.1} parent=1 // pred_check
      _
    $region23: #{tpu_custom_call.1} parent=1 // pred_check_branch
      %151 = sbr.rel (0) target = $region25
    $region24: #{tpu_custom_call.1} parent=1 // pred_region
      %152 = dma.done [#allocation4], 16
    $region25: #{tpu_custom_call.1} parent=1 // pred_fallthru
      _
    %153 = vsyncpa [#allocation3], 1
    %154 = vsyncpa [#allocation6], 1
    %155 = vsyncpa [#allocation4], 1

</llo_original>
